<compile_context>
chip_gen: v5e
topology: v5e:2x2
jax: 0.10.0
libtpu: 0.0.40
codegen_flags: <defaults>
</compile_context>

<pallas_src>
import functools

import jax
import jax.numpy as jnp
from jax.experimental import pallas as pl
from jax.experimental.pallas import tpu as pltpu

LN_EPS = 1e-5


def _round_up(x: int, m: int) -> int:
    return ((x + m - 1) // m) * m


def _vmem_plan():
    """(working budget, vmem_limit cap) derived from per-core VMEM capacity."""
    try:
        cap = int(pltpu.get_tpu_info().vmem_capacity_bytes)
    except Exception:
        cap = 64 << 20                       # conservative: v7x per-core VMEM
    # Leave >= 16 MiB of headroom for Mosaic internal scratch / semaphores.
    limit_cap = max(24 << 20, min(cap - (16 << 20), int(cap * 0.80)))
    budget = min(int(cap * 0.70), limit_cap - (6 << 20))
    return budget, limit_cap


# ---------------------------------------------------------------------------
# Kernels
# ---------------------------------------------------------------------------
def _vrnn_kernel_packed(t_ref, s_ref, w_ref, p_ref, sum_ref, o_ref):
    """Lane-packed path: F divides 128, P = 128 // F feature groups per row.

    t/s/o: [bm, FP] (FP = P*F); w: [FP, FP] bf16 block-diag replicated W^T;
    p: [3, FP] f32 (bias, gamma, beta tiled P times);
    sum: [FP, FP] bf16 block-diag (1/F) averaging matrix.
    """
    t = t_ref[...]
    s = s_ref[...]

    # Linear(tensor + state): bf16 MXU operands, f32 accumulation.
    ts = (t + s).astype(jnp.bfloat16)
    y = jnp.dot(ts, w_ref[...], preferred_element_type=jnp.float32)

    params = p_ref[...]                               # [3, FP] f32
    y = jnp.maximum(y + params[0:1, :], 0.0)          # + bias, relu (f32 VPU)
    # TODO(synk): dropout is identity here (inference / training=False); a
    # training variant would draw a mask via pltpu.prng_random_bits.
    z = y + t.astype(jnp.float32)                     # residual, f32

    # Per-group LayerNorm stats via two *independent* bf16 matmuls against the
    # block-diagonal 1/F matrix (no MXU->VPU->MXU serialization):
    #   mean = E[z], var = E[z^2] - mean^2 (clamped at 0).
    zb = z.astype(jnp.bfloat16)
    z2b = (z * z).astype(jnp.bfloat16)
    mean = jnp.dot(zb, sum_ref[...], preferred_element_type=jnp.float32)
    ez2 = jnp.dot(z2b, sum_ref[...], preferred_element_type=jnp.float32)
    var = jnp.maximum(ez2 - mean * mean, 0.0)

    out = (z - mean) * jax.lax.rsqrt(var + LN_EPS) * params[1:2, :] + params[2:3, :]
    o_ref[...] = out.astype(o_ref.dtype)


def _vrnn_kernel_full(t_ref, s_ref, w_ref, p_ref, o_ref, *, feat):
    """Unpacked path: F (possibly zero-padded to Fpad) is the full lane axis.

    w: [Fpad, Fpad] bf16 in torch [out, in] layout (contracted on last dims).
    feat: real feature count (LayerNorm divisor); padding lanes are zero.
    """
    t = t_ref[...]
    s = s_ref[...]
    ts = (t + s).astype(jnp.bfloat16)
    y = jax.lax.dot_general(ts, w_ref[...],
                            dimension_numbers=(((1,), (1,)), ((), ())),
                            preferred_element_type=jnp.float32)
    params = p_ref[...]                               # [3, Fpad] f32
    y = jnp.maximum(y + params[0:1, :], 0.0)
    # TODO(synk): dropout is identity here (inference mode).
    z = y + t.astype(jnp.float32)

    inv_f = 1.0 / feat
    mean = jnp.sum(z, axis=-1, keepdims=True) * inv_f
    cent = z - mean
    if feat != z.shape[-1]:                           # static: mask padding lanes
        lane = jax.lax.broadcasted_iota(jnp.int32, z.shape, 1)
        cent = jnp.where(lane < feat, cent, 0.0)
    var = jnp.sum(cent * cent, axis=-1, keepdims=True) * inv_f
    out = cent * jax.lax.rsqrt(var + LN_EPS) * params[1:2, :] + params[2:3, :]
    o_ref[...] = out.astype(o_ref.dtype)


def _vrnn_kernel_ktiled(t_ref, tc_ref, sc_ref, w_ref, p_ref, o_ref, acc_ref, *, feat):
    """Large-F path: reduction (K) grid axis streams [tk, Fpad] W^T blocks.

    t: [bm, Fpad] full row block (residual), revisited across k.
    tc/sc: [bm, tk] tensor/state K-chunks.  w: [tk, Fpad] bf16 W^T block.
    acc: [bm, Fpad] f32 VMEM accumulator (pl.when init / finalize).
    """
    k = pl.program_id(1)

    @pl.when(k == 0)
    def _():
        acc_ref[...] = jnp.zeros_like(acc_ref)

    ts = (tc_ref[...] + sc_ref[...]).astype(jnp.bfloat16)
    acc_ref[...] += jnp.dot(ts, w_ref[...], preferred_element_type=jnp.float32)

    @pl.when(k == pl.num_programs(1) - 1)
    def _():
        params = p_ref[...]
        y = jnp.maximum(acc_ref[...] + params[0:1, :], 0.0)
        # TODO(synk): dropout is identity here (inference mode).
        z = y + t_ref[...].astype(jnp.float32)
        inv_f = 1.0 / feat
        mean = jnp.sum(z, axis=-1, keepdims=True) * inv_f
        cent = z - mean
        if feat != z.shape[-1]:
            lane = jax.lax.broadcasted_iota(jnp.int32, z.shape, 1)
            cent = jnp.where(lane < feat, cent, 0.0)
        var = jnp.sum(cent * cent, axis=-1, keepdims=True) * inv_f
        out = cent * jax.lax.rsqrt(var + LN_EPS) * params[1:2, :] + params[2:3, :]
        o_ref[...] = out.astype(o_ref.dtype)


# ---------------------------------------------------------------------------
# Wrapper
# ---------------------------------------------------------------------------
@functools.partial(jax.jit, static_argnames=("block_rows", "vmem_budget_bytes"))
def vrnn_forward(tensor, state, weight, bias, gamma, beta, *,
                 block_rows=2048, vmem_budget_bytes=None):
    """tensor, state: [B, T, F]; weight: [F, F] (torch [out, in] layout);
    bias/gamma/beta: [F].  Returns [B, T, F] (same dtype as `tensor`)."""
    B, T, F = tensor.shape
    M = B * T
    dtype = tensor.dtype
    itemsize = jnp.dtype(dtype).itemsize

    budget, limit_cap = _vmem_plan()
    if vmem_budget_bytes is not None:
        budget = int(vmem_budget_bytes)

    # ---- lane-dense layout decision ---------------------------------------
    if 128 % F == 0:
        P = 128 // F                  # pack P feature groups per 128-lane vreg
    else:
        P = 1
    packed = P > 1
    Fpad = P * F if packed else _round_up(F, 128)     # in-kernel lane width

    # Grid-invariant params folded into one f32 [3, Fpad] array (one DMA desc).
    def _padf(v):
        v = v.astype(jnp.float32)
        return jnp.tile(v, P) if packed else jnp.pad(v, (0, Fpad - F))
    params = jnp.stack([_padf(bias), _padf(gamma), _padf(beta)], axis=0)

    t2 = tensor.reshape(M, F)
    s2 = state.reshape(M, F)
    if not packed and Fpad != F:                      # zero-pad lanes (lane-dense out)
        t2 = jnp.pad(t2, ((0, 0), (0, Fpad - F)))
        s2 = jnp.pad(s2, ((0, 0), (0, Fpad - F)))

    # ---- VMEM accounting & path choice -------------------------------------
    if packed:
        const_bytes = 2 * (Fpad * Fpad * 2) + params.size * 4   # W^T blkdiag + sum + params
    else:
        const_bytes = Fpad * Fpad * 2 + params.size * 4         # bf16 weight + params
    # Grid-invariant consts are revisited (no per-step DMA); single-buffer them
    # when they are big enough for the VMEM saving to matter.
    single_buf_consts = const_bytes > (4 << 20)
    const_factor = 1 if single_buf_consts else 2
    resident = const_factor * const_bytes

    # Per-row VMEM: tensor/state/out double-buffered + in-kernel f32 temporaries.
    per_row = 3 * 2 * Fpad * itemsize + 8 * Fpad * 4
    fit = ((budget - resident) // per_row) // 8 * 8
    use_ktiled = (not packed) and (fit < 256) and (Fpad > 128)

    packed_rows = -(-M // P)
    # Aim for >= ~8 grid steps (but >= 512-row tiles) so the "parallel" rows
    # axis can shard across v7x's two TensorCores and keep the pipeline fed.
    split_cap = max(512, _round_up(-(-packed_rows // 8), 8))

    # ------------------------------------------------------------------ paths
    if not use_ktiled:
        block = min(block_rows, max(fit, 8), split_cap,
                    _round_up(max(packed_rows, 1), 8))
        block = max(8, (block // 8) * 8)
        rows_packed = _round_up(packed_rows, block)
        rows_pad = rows_packed * P

        if rows_pad != M:
            pad = rows_pad - M
            t2 = jnp.pad(t2, ((0, pad), (0, 0)))
            s2 = jnp.pad(s2, ((0, pad), (0, 0)))
        t2 = t2.reshape(rows_packed, Fpad)
        s2 = s2.reshape(rows_packed, Fpad)

        grid = (rows_packed // block,)
        row_spec = pl.BlockSpec((block, Fpad), lambda i: (i, 0))

        def const_spec(shape):
            if single_buf_consts:
                return pl.BlockSpec(shape, lambda i: (0, 0),
                                    pipeline_mode=pl.Buffered(1))
            return pl.BlockSpec(shape, lambda i: (0, 0))

        if packed:
            # Block-diagonal replicated W^T and (1/F) averaging matrix as bf16
            # MXU operands (1/F exact in bf16: F divides 128 => power of two).
            w_op = jnp.kron(jnp.eye(P, dtype=jnp.float32),
                            weight.T.astype(jnp.float32)).astype(jnp.bfloat16)
            sum_op = jnp.kron(jnp.eye(P, dtype=jnp.float32),
                              jnp.full((F, F), 1.0 / F, dtype=jnp.float32)
                              ).astype(jnp.bfloat16)
            kernel = _vrnn_kernel_packed
            operands = (t2, s2, w_op, params, sum_op)
            in_specs = [row_spec, row_spec, const_spec((Fpad, Fpad)),
                        const_spec((3, Fpad)), const_spec((Fpad, Fpad))]
        else:
            w_full = jnp.pad(weight.astype(jnp.bfloat16),
                             ((0, Fpad - F), (0, Fpad - F)))   # torch [out, in]
            kernel = functools.partial(_vrnn_kernel_full, feat=F)
            operands = (t2, s2, w_full, params)
            in_specs = [row_spec, row_spec, const_spec((Fpad, Fpad)),
                        const_spec((3, Fpad))]

        vmem_need = resident + per_row * block + (4 << 20)
        out = pl.pallas_call(
            kernel,
            out_shape=jax.ShapeDtypeStruct((rows_packed, Fpad), dtype),
            grid=grid,
            in_specs=in_specs,
            out_specs=pl.BlockSpec((block, Fpad), lambda i: (i, 0)),
            compiler_params=pltpu.CompilerParams(
                dimension_semantics=("parallel",),
                vmem_limit_bytes=int(min(max(vmem_need, 16 << 20), limit_cap))),
        )(*operands)

        if packed:
            out = out.reshape(rows_packed * P, F)
        else:
            out = out[:, :F]
        return out[:M].reshape(B, T, F)

    # ---- K-tiled large-F path ----------------------------------------------
    # Stream [tk, Fpad] W^T blocks along a reduction grid axis, accumulate the
    # [block, Fpad] linear output in an f32 VMEM scratch, LayerNorm + store at
    # the last K step.
    tk = 512 if Fpad % 512 == 0 else (256 if Fpad % 256 == 0 else 128)
    w_t = jnp.pad(weight.astype(jnp.bfloat16),
                  ((0, Fpad - F), (0, Fpad - F))).T           # [in, out], padded

    resident_kt = 2 * (tk * Fpad * 2) + 2 * params.size * 4   # streaming W blocks
    per_row_kt = (4 * Fpad * itemsize + Fpad * 4 + 4 * tk * itemsize
                  + 6 * Fpad * 4)                             # rows + acc + temps
    fit_kt = max(8, ((budget - resident_kt) // per_row_kt) // 8 * 8)
    block = min(block_rows, fit_kt, split_cap, _round_up(max(M, 1), 8))
    block = max(8, (block // 8) * 8)

    rows = _round_up(M, block)
    if rows != M:
        t2 = jnp.pad(t2, ((0, rows - M), (0, 0)))
        s2 = jnp.pad(s2, ((0, rows - M), (0, 0)))

    grid = (rows // block, Fpad // tk)
    kernel = functools.partial(_vrnn_kernel_ktiled, feat=F)
    vmem_need = resident_kt + per_row_kt * block + (4 << 20)

    out = pl.pallas_call(
        kernel,
        out_shape=jax.ShapeDtypeStruct((rows, Fpad), dtype),
        grid=grid,
        in_specs=[
            pl.BlockSpec((block, Fpad), lambda i, k: (i, 0)),  # full rows (residual)
            pl.BlockSpec((block, tk), lambda i, k: (i, k)),    # tensor K-chunk
            pl.BlockSpec((block, tk), lambda i, k: (i, k)),    # state K-chunk
            pl.BlockSpec((tk, Fpad), lambda i, k: (k, 0)),     # W^T block (streams)
            pl.BlockSpec((3, Fpad), lambda i, k: (0, 0)),      # params (revisited)
        ],
        out_specs=pl.BlockSpec((block, Fpad), lambda i, k: (i, 0)),
        scratch_shapes=[pltpu.VMEM((block, Fpad), jnp.float32)],
        compiler_params=pltpu.CompilerParams(
            dimension_semantics=("parallel", "arbitrary"),
            vmem_limit_bytes=int(min(max(vmem_need, 16 << 20), limit_cap))),
    )(t2, t2, s2, w_t, params)

    return out[:M, :F].reshape(B, T, F)


def _reference(tensor, state, weight, bias, gamma, beta):
    x = jnp.einsum("btf,gf->btg", tensor + state, weight) + bias
    x = jnp.maximum(x, 0.0)
    z = x + tensor
    mean = jnp.mean(z, axis=-1, keepdims=True)
    var = jnp.mean((z - mean) ** 2, axis=-1, keepdims=True)
    return (z - mean) / jnp.sqrt(var + LN_EPS) * gamma + beta


if __name__ == "__main__":
    B, T, F = 2, 8, 32  # small shapes: batch=2, seq=8, input_dim=32

    key = jax.random.PRNGKey(0)
    k_t, k_s, k_w, k_b = jax.random.split(key, 4)

    tensor = jax.random.normal(k_t, (B, T, F), dtype=jnp.float32)
    state = jax.random.normal(k_s, (B, T, F), dtype=jnp.float32)

    # Deterministic parameter init (torch.nn.Linear-style uniform bounds).
    bound = 1.0 / (F ** 0.5)
    weight = jax.random.uniform(k_w, (F, F), minval=-bound, maxval=bound,
                                dtype=jnp.float32)   # torch layout [out, in]
    bias = jax.random.uniform(k_b, (F,), minval=-bound, maxval=bound,
                              dtype=jnp.float32)
    gamma = jnp.ones((F,), dtype=jnp.float32)   # LayerNorm weight init
    beta = jnp.zeros((F,), dtype=jnp.float32)   # LayerNorm bias init

    out = vrnn_forward(tensor, state, weight, bias, gamma, beta)
    jax.block_until_ready(out)

    ref = _reference(tensor, state, weight, bias, gamma, beta)
    assert out.shape == (B, T, F)
    # bf16 MXU operands (linear + LN-stats matmuls) => relaxed tolerance vs the
    # f32 reference; typical max error observed is ~1e-2.
    assert jnp.allclose(out, ref, atol=3e-2, rtol=3e-2), (
        "mismatch vs reference, max abs err = "
        f"{float(jnp.max(jnp.abs(out - ref)))}")

    print("KERNEL_OK")
</pallas_src>

<mosaic_0001>
module attributes {stable_mosaic.version = 11 : i64} {
  func.func @_vrnn_kernel_packed(%arg0: i32, %arg1: memref<8x128xf32, #tpu.memory_space<vmem>>, %arg2: memref<8x128xf32, #tpu.memory_space<vmem>>, %arg3: memref<128x128xbf16, #tpu.memory_space<vmem>>, %arg4: memref<3x128xf32, #tpu.memory_space<vmem>>, %arg5: memref<128x128xbf16, #tpu.memory_space<vmem>>, %arg6: memref<8x128xf32, #tpu.memory_space<vmem>>) attributes {dimension_semantics = [#tpu.dimension_semantics<parallel>], iteration_bounds = array<i64: 1>, scalar_prefetch = 0 : i64, scratch_operands = 0 : i64, tpu.core_type = #tpu.core_type<tc>, window_params = [{transform_indices = @transform_0, window_bounds = array<i64: 8, 128>}, {transform_indices = @transform_1, window_bounds = array<i64: 8, 128>}, {pipeline_mode = #tpu.pipeline_mode<synchronous>, transform_indices = @transform_2, window_bounds = array<i64: 128, 128>}, {pipeline_mode = #tpu.pipeline_mode<synchronous>, transform_indices = @transform_3, window_bounds = array<i64: 3, 128>}, {pipeline_mode = #tpu.pipeline_mode<synchronous>, transform_indices = @transform_4, window_bounds = array<i64: 128, 128>}, {transform_indices = @transform_5, window_bounds = array<i64: 8, 128>}]} {
    %c0 = arith.constant 0 : index
    %c0_0 = arith.constant 0 : index
    %0 = vector.load %arg1[%c0, %c0_0] : memref<8x128xf32, #tpu.memory_space<vmem>>, vector<8x128xf32>
    %c0_1 = arith.constant 0 : index
    %c0_2 = arith.constant 0 : index
    %1 = vector.load %arg2[%c0_1, %c0_2] : memref<8x128xf32, #tpu.memory_space<vmem>>, vector<8x128xf32>
    %2 = arith.addf %0, %1 : vector<8x128xf32>
    %3 = arith.truncf %2 : vector<8x128xf32> to vector<8x128xbf16>
    %c0_3 = arith.constant 0 : index
    %c0_4 = arith.constant 0 : index
    %4 = vector.load %arg3[%c0_3, %c0_4] : memref<128x128xbf16, #tpu.memory_space<vmem>>, vector<128x128xbf16>
    %cst = arith.constant dense<0.000000e+00> : vector<8x128xf32>
    %5 = tpu.matmul %3, %4, %cst {dimension_numbers = #tpu.dot_dimension_numbers<[1], [0], [0], [1], [0, 0, 1, 1], [], []>} : vector<8x128xbf16>, vector<128x128xbf16>, vector<8x128xf32> -> vector<8x128xf32>
    %c0_5 = arith.constant 0 : index
    %c0_6 = arith.constant 0 : index
    %6 = vector.load %arg4[%c0_5, %c0_6] : memref<3x128xf32, #tpu.memory_space<vmem>>, vector<3x128xf32>
    %7 = vector.extract_strided_slice %6 {offsets = [0, 0], sizes = [1, 128], strides = [1, 1]} : vector<3x128xf32> to vector<1x128xf32>
    %8 = vector.broadcast %7 : vector<1x128xf32> to vector<8x128xf32>
    %9 = arith.addf %5, %8 : vector<8x128xf32>
    %cst_7 = arith.constant 0.000000e+00 : f32
    %10 = vector.broadcast %cst_7 : f32 to vector<8x128xf32>
    %11 = arith.maximumf %9, %10 : vector<8x128xf32>
    %12 = arith.addf %11, %0 : vector<8x128xf32>
    %13 = arith.truncf %12 : vector<8x128xf32> to vector<8x128xbf16>
    %14 = arith.mulf %12, %12 : vector<8x128xf32>
    %15 = arith.truncf %14 : vector<8x128xf32> to vector<8x128xbf16>
    %c0_8 = arith.constant 0 : index
    %c0_9 = arith.constant 0 : index
    %16 = vector.load %arg5[%c0_8, %c0_9] : memref<128x128xbf16, #tpu.memory_space<vmem>>, vector<128x128xbf16>
    %cst_10 = arith.constant dense<0.000000e+00> : vector<8x128xf32>
    %17 = tpu.matmul %13, %16, %cst_10 {dimension_numbers = #tpu.dot_dimension_numbers<[1], [0], [0], [1], [0, 0, 1, 1], [], []>} : vector<8x128xbf16>, vector<128x128xbf16>, vector<8x128xf32> -> vector<8x128xf32>
    %c0_11 = arith.constant 0 : index
    %c0_12 = arith.constant 0 : index
    %18 = vector.load %arg5[%c0_11, %c0_12] : memref<128x128xbf16, #tpu.memory_space<vmem>>, vector<128x128xbf16>
    %cst_13 = arith.constant dense<0.000000e+00> : vector<8x128xf32>
    %19 = tpu.matmul %15, %18, %cst_13 {dimension_numbers = #tpu.dot_dimension_numbers<[1], [0], [0], [1], [0, 0, 1, 1], [], []>} : vector<8x128xbf16>, vector<128x128xbf16>, vector<8x128xf32> -> vector<8x128xf32>
    %20 = arith.mulf %17, %17 : vector<8x128xf32>
    %21 = arith.subf %19, %20 : vector<8x128xf32>
    %cst_14 = arith.constant 0.000000e+00 : f32
    %22 = vector.broadcast %cst_14 : f32 to vector<8x128xf32>
    %23 = arith.maximumf %21, %22 : vector<8x128xf32>
    %24 = arith.subf %12, %17 : vector<8x128xf32>
    %cst_15 = arith.constant 9.99999974E-6 : f32
    %25 = vector.broadcast %cst_15 : f32 to vector<8x128xf32>
    %26 = arith.addf %23, %25 : vector<8x128xf32>
    %27 = math.rsqrt %26 : vector<8x128xf32>
    %28 = arith.mulf %24, %27 : vector<8x128xf32>
    %29 = vector.extract_strided_slice %6 {offsets = [1, 0], sizes = [1, 128], strides = [1, 1]} : vector<3x128xf32> to vector<1x128xf32>
    %30 = vector.broadcast %29 : vector<1x128xf32> to vector<8x128xf32>
    %31 = arith.mulf %28, %30 : vector<8x128xf32>
    %32 = vector.extract_strided_slice %6 {offsets = [2, 0], sizes = [1, 128], strides = [1, 1]} : vector<3x128xf32> to vector<1x128xf32>
    %33 = vector.broadcast %32 : vector<1x128xf32> to vector<8x128xf32>
    %34 = arith.addf %31, %33 : vector<8x128xf32>
    %c0_16 = arith.constant 0 : index
    %c0_17 = arith.constant 0 : index
    %35 = vector.load %arg6[%c0_16, %c0_17] : memref<8x128xf32, #tpu.memory_space<vmem>>, vector<8x128xf32>
    tpu.vector_store %arg6[%c0_16, %c0_17], %34 {strides = array<i32>} : memref<8x128xf32, #tpu.memory_space<vmem>>, vector<8x128xf32>,
    return
  }
  func.func @transform_0(%arg0: i32) -> (i32, i32) {
    %c0_i32 = arith.constant 0 : i32
    %c0_i32_0 = arith.constant 0 : i32
    return %arg0, %c0_i32 : i32, i32
  }
  func.func @transform_1(%arg0: i32) -> (i32, i32) {
    %c0_i32 = arith.constant 0 : i32
    %c0_i32_0 = arith.constant 0 : i32
    return %arg0, %c0_i32 : i32, i32
  }
  func.func @transform_2(%arg0: i32) -> (i32, i32) {
    %c0_i32 = arith.constant 0 : i32
    %c0_i32_0 = arith.constant 0 : i32
    %c0_i32_1 = arith.constant 0 : i32
    return %c0_i32, %c0_i32_0 : i32, i32
  }
  func.func @transform_3(%arg0: i32) -> (i32, i32) {
    %c0_i32 = arith.constant 0 : i32
    %c0_i32_0 = arith.constant 0 : i32
    %c0_i32_1 = arith.constant 0 : i32
    return %c0_i32, %c0_i32_0 : i32, i32
  }
  func.func @transform_4(%arg0: i32) -> (i32, i32) {
    %c0_i32 = arith.constant 0 : i32
    %c0_i32_0 = arith.constant 0 : i32
    %c0_i32_1 = arith.constant 0 : i32
    return %c0_i32, %c0_i32_0 : i32, i32
  }
  func.func @transform_5(%arg0: i32) -> (i32, i32) {
    %c0_i32 = arith.constant 0 : i32
    %c0_i32_0 = arith.constant 0 : i32
    return %arg0, %c0_i32 : i32, i32
  }
}

</mosaic_0001>

<llo_original>
// kernel: tile.18
$region0: #{tile.18}
  #allocation0 [shape = 's32[1]{0}', space=sflag, size = 0x4, scoped, tag = 'scoped memory for tile.18']
  %s0 = inlined_call_operand.vmem [shape: f32[32], index: 0, kind: input, shape index: {}]
  %s1 = inlined_call_operand.vmem [shape: f32[4,32], index: 1, kind: output, shape index: {}]
  // Predicated region
  $region2: #{tile.18} parent=0 // pred_check
    _
  $region3: #{tile.18} parent=0 // pred_check_branch
    %3 = sbr.rel (0) target = $region5
  $region4: #{tile.18} parent=0 // pred_region
    _
  $region5: #{tile.18} parent=0 // pred_fallthru
    _
  %v4 = vld [vmem:[%s0] ss:$0 sm:$0xff]
  %5 = vst [vmem:[%s1] sm:$0xf] %v4

// kernel: tile.27
$region0: #{tile.27}
  %s0 = inlined_call_operand.vmem [shape: f32[4,32], index: 0, kind: input, shape index: {}]
  %s1 = inlined_call_operand.vmem [shape: f32[1,128], index: 1, kind: output, shape index: {}]
  $region1: #{tile.27} parent=0
    #allocation0 [shape = 'u8[4096]{0}', space=vmem, size = 0x1000, scoped, tag = 'scoped mem for output reshape']
    #allocation1 [shape = 'u8[4096]{0}', space=vmem, size = 0x1000, scoped, tag = 'scoped mem for input reshape']
    %s3 = ssub.s32 16, 1
    %v4 = vld [vmem:[%s0] sm:%s3]
    %5 = vst [vmem:[#allocation1] sm:%s3] %v4
    %v6 = vld [vmem:[#allocation1] sm:$0x1]
    %vm7 = vcmask 261120
    %8 = vst.msk [vmem:[#allocation0] sm:$0x1] %vm7, %v6
    %s9 = scalar_lea.vmem [#allocation1], 3
    %v10 = vld [vmem:[%s9] sm:$0x1]
    %11 = vrot.lane.b32.xlu0 %v10, 96
    %v12 = vpop.permute.xlu0 %11
    %vm13 = vcmask 1048320
    %14 = vst.msk [vmem:[#allocation0] sm:$0x1] %vm13, %v12
    %s15 = scalar_lea.vmem [#allocation1], 2
    %v16 = vld [vmem:[%s15] sm:$0x1]
    %17 = vrot.lane.b32.xlu0 %v16, 64
    %v18 = vpop.permute.xlu0 %17
    %vm19 = vcmask 785920
    %20 = vst.msk [vmem:[#allocation0] sm:$0x1] %vm19, %v18
    %s21 = scalar_lea.vmem [#allocation1], 1
    %v22 = vld [vmem:[%s21] sm:$0x1]
    %23 = vrot.lane.b32.xlu0 %v22, 32
    %v24 = vpop.permute.xlu0 %23
    %vm25 = vcmask 523520
    %26 = vst.msk [vmem:[#allocation0] sm:$0x1] %vm25, %v24
    %s28 = ssub.s32 2, 1
    %v29 = vld [vmem:[#allocation0] sm:%s28]
    %s31 = ssub.s32 2, 1
    %32 = vst [vmem:[%s1] sm:%s31] %v29

// kernel: vrnn_forward.1
$region0: #{vrnn_forward.1}
  #allocation0 [shape = 'u32[]', space=smem, size = 0x4, offset = 0x4, fixed_abs, tag = 'smem constant byte address 0x4 - core index']
  #allocation1 [shape = 'u32[72,128]{1,0:T(1,128)}', space=vmem, size = 0x9000, scoped, tag = 'internal scratch']
  %s0 = inlined_call_operand.vmem [shape: f32[8,128], index: 0, kind: input, shape index: {}]
  %s1 = inlined_call_operand.vmem [shape: f32[8,128], index: 1, kind: input, shape index: {}]
  %s2 = inlined_call_operand.vmem [shape: bf16[128,128], index: 2, kind: input, shape index: {}]
  %s3 = inlined_call_operand.vmem [shape: f32[3,128], index: 3, kind: input, shape index: {}]
  %s4 = inlined_call_operand.vmem [shape: bf16[128,128], index: 4, kind: input, shape index: {}]
  %s5 = inlined_call_operand.vmem [shape: f32[8,128], index: 5, kind: output, shape index: {}]
  %s6 = sld [smem:[#allocation0]]
  $region30: #{vrnn_forward.1} parent=0
    _
  %s8 = ssub.s32 1, %s6
  %s9 = scalar_select 0, %s8, %s6
  // Predicated region
  $region2: #{vrnn_forward.1} parent=0 // pred_check
    _
  $region3: #{vrnn_forward.1} parent=0 // pred_check_branch
    %11 = sbr.rel (0) target = $region5
  $region4: #{vrnn_forward.1} parent=0 // pred_region
    _
  $region5: #{vrnn_forward.1} parent=0 // pred_fallthru
    _
  // Predicated region
  $region6: #{vrnn_forward.1} parent=0 // pred_check
    _
  $region7: #{vrnn_forward.1} parent=0 // pred_check_branch
    %13 = sbr.rel (0) target = $region9
  $region8: #{vrnn_forward.1} parent=0 // pred_region
    _
  $region9: #{vrnn_forward.1} parent=0 // pred_fallthru
    _
  // Predicated region
  $region10: #{vrnn_forward.1} parent=0 // pred_check
    _
  $region11: #{vrnn_forward.1} parent=0 // pred_check_branch
    %15 = sbr.rel (0) target = $region13
  $region12: #{vrnn_forward.1} parent=0 // pred_region
    _
  $region13: #{vrnn_forward.1} parent=0 // pred_fallthru
    _
  // Predicated region
  $region14: #{vrnn_forward.1} parent=0 // pred_check
    _
  $region15: #{vrnn_forward.1} parent=0 // pred_check_branch
    %17 = sbr.rel (0) target = $region17
  $region16: #{vrnn_forward.1} parent=0 // pred_region
    _
  $region17: #{vrnn_forward.1} parent=0 // pred_fallthru
    _
  // Predicated region
  $region18: #{vrnn_forward.1} parent=0 // pred_check
    _
  $region19: #{vrnn_forward.1} parent=0 // pred_check_branch
    %19 = sbr.rel (0) target = $region21
  $region20: #{vrnn_forward.1} parent=0 // pred_region
    _
  $region21: #{vrnn_forward.1} parent=0 // pred_fallthru
    _
  %v20 = vld [vmem:[%s0] sm:$0xff]
  %v21 = vld [vmem:[%s1] sm:$0xff]
  %v22 = vadd.f32 %v20, %v21
  %v23 = vpack.c.bf16 %v22, %v22
  %v24 = vld [vmem:[%s2] sm:$0xf]
  %v25 = vld [vmem:[%s2 + $0x4] sm:$0xf]
  %v26 = vld [vmem:[%s2 + $0x8] sm:$0xf]
  %v27 = vld [vmem:[%s2 + $0xc] sm:$0xf]
  %v28 = vld [vmem:[%s2 + $0x10] sm:$0xf]
  %v29 = vld [vmem:[%s2 + $0x14] sm:$0xf]
  %v30 = vld [vmem:[%s2 + $0x18] sm:$0xf]
  %v31 = vld [vmem:[%s2 + $0x1c] sm:$0xf]
  %v32 = vld [vmem:[%s2 + $0x20] sm:$0xf]
  %v33 = vld [vmem:[%s2 + $0x24] sm:$0xf]
  %v34 = vld [vmem:[%s2 + $0x28] sm:$0xf]
  %v35 = vld [vmem:[%s2 + $0x2c] sm:$0xf]
  %v36 = vld [vmem:[%s2 + $0x30] sm:$0xf]
  %v37 = vld [vmem:[%s2 + $0x34] sm:$0xf]
  %v38 = vld [vmem:[%s2 + $0x38] sm:$0xf]
  %v39 = vld [vmem:[%s2 + $0x3c] sm:$0xf]
  %v40 = vld [vmem:[%s3] sm:$0x7]
  %v41 = vperm.slane %v40, 0
  %v58 = vunpack.c.l.b16 %v24
  %v59 = vunpack.c.l.b16 %v25
  %v60 = vunpack.c.l.b16 %v26
  %v61 = vunpack.c.l.b16 %v27
  %v62 = vunpack.c.l.b16 %v28
  %v63 = vunpack.c.l.b16 %v29
  %v64 = vunpack.c.l.b16 %v30
  %v65 = vunpack.c.l.b16 %v31
  %v66 = vunpack.c.l.b16 %v32
  %v67 = vunpack.c.l.b16 %v33
  %v68 = vunpack.c.l.b16 %v34
  %v69 = vunpack.c.l.b16 %v35
  %v70 = vunpack.c.l.b16 %v36
  %v71 = vunpack.c.l.b16 %v37
  %v72 = vunpack.c.l.b16 %v38
  %v73 = vunpack.c.l.b16 %v39
  %v74 = vpack.c.b16 %v59, %v58
  %v75 = vpack.c.b16 %v61, %v60
  %v76 = vpack.c.b16 %v63, %v62
  %v77 = vpack.c.b16 %v65, %v64
  %v78 = vpack.c.b16 %v67, %v66
  %v79 = vpack.c.b16 %v69, %v68
  %v80 = vpack.c.b16 %v71, %v70
  %v81 = vpack.c.b16 %v73, %v72
  %90 = vmatpush.bf16.msra.mxu0 %v81
  %91 = vmatpush.bf16.msra.mxu0 %v80
  %92 = vmatpush.bf16.msra.mxu0 %v79
  %93 = vmatpush.bf16.msra.mxu0 %v78
  %94 = vmatpush.bf16.msra.mxu0 %v77
  %95 = vmatpush.bf16.msra.mxu0 %v76
  %96 = vmatpush.bf16.msra.mxu0 %v75
  %97 = vmatpush.bf16.msra.mxu0 %v74
  %98 = vmatmul.bf16.gmra.mxu0 %v23
  %v99 = vpop.f32.mrf.mxu0
  %v100 = vadd.f32 %v41, %v99
  %v101 = vpop.f32.mrf.mxu0
  %102 = vdwg.mxu0
  %v103 = vmax.f32 %v100, 0.0
  %v104 = vadd.f32 %v103, %v20
  %v105 = vpack.c.bf16 %v104, %v104
  %v106 = vmul.f32 %v104, %v104
  %v107 = vpack.c.bf16 %v106, %v106
  %v108 = vld [vmem:[%s4] sm:$0xf]
  %v109 = vld [vmem:[%s4 + $0x4] sm:$0xf]
  %v110 = vld [vmem:[%s4 + $0x8] sm:$0xf]
  %v111 = vld [vmem:[%s4 + $0xc] sm:$0xf]
  %v112 = vld [vmem:[%s4 + $0x10] sm:$0xf]
  %v113 = vld [vmem:[%s4 + $0x14] sm:$0xf]
  %v114 = vld [vmem:[%s4 + $0x18] sm:$0xf]
  %v115 = vld [vmem:[%s4 + $0x1c] sm:$0xf]
  %v116 = vld [vmem:[%s4 + $0x20] sm:$0xf]
  %v117 = vld [vmem:[%s4 + $0x24] sm:$0xf]
  %v118 = vld [vmem:[%s4 + $0x28] sm:$0xf]
  %v119 = vld [vmem:[%s4 + $0x2c] sm:$0xf]
  %v120 = vld [vmem:[%s4 + $0x30] sm:$0xf]
  %v121 = vld [vmem:[%s4 + $0x34] sm:$0xf]
  %v122 = vld [vmem:[%s4 + $0x38] sm:$0xf]
  %v123 = vld [vmem:[%s4 + $0x3c] sm:$0xf]
  %v140 = vunpack.c.l.b16 %v108
  %v141 = vunpack.c.l.b16 %v109
  %v142 = vunpack.c.l.b16 %v110
  %v143 = vunpack.c.l.b16 %v111
  %v144 = vunpack.c.l.b16 %v112
  %v145 = vunpack.c.l.b16 %v113
  %v146 = vunpack.c.l.b16 %v114
  %v147 = vunpack.c.l.b16 %v115
  %v148 = vunpack.c.l.b16 %v116
  %v149 = vunpack.c.l.b16 %v117
  %v150 = vunpack.c.l.b16 %v118
  %v151 = vunpack.c.l.b16 %v119
  %v152 = vunpack.c.l.b16 %v120
  %v153 = vunpack.c.l.b16 %v121
  %v154 = vunpack.c.l.b16 %v122
  %v155 = vunpack.c.l.b16 %v123
  %v156 = vpack.c.b16 %v141, %v140
  %v157 = vpack.c.b16 %v143, %v142
  %v158 = vpack.c.b16 %v145, %v144
  %v159 = vpack.c.b16 %v147, %v146
  %v160 = vpack.c.b16 %v149, %v148
  %v161 = vpack.c.b16 %v151, %v150
  %v162 = vpack.c.b16 %v153, %v152
  %v163 = vpack.c.b16 %v155, %v154
  %172 = vmatpush.bf16.msra.mxu0 %v163
  %173 = vmatpush.bf16.msra.mxu0 %v162
  %174 = vmatpush.bf16.msra.mxu0 %v161
  %175 = vmatpush.bf16.msra.mxu0 %v160
  %176 = vmatpush.bf16.msra.mxu0 %v159
  %177 = vmatpush.bf16.msra.mxu0 %v158
  %178 = vmatpush.bf16.msra.mxu0 %v157
  %179 = vmatpush.bf16.msra.mxu0 %v156
  %180 = vmatmul.bf16.gmra.mxu0 %v105
  %v181 = vpop.f32.mrf.mxu0
  %v182 = vadd.f32 0.0, %v181
  %v183 = vpop.f32.mrf.mxu0
  %184 = vdwg.mxu0
  %185 = vmatpush.bf16.msra.mxu0 %v163
  %186 = vmatpush.bf16.msra.mxu0 %v162
  %187 = vmatpush.bf16.msra.mxu0 %v161
  %188 = vmatpush.bf16.msra.mxu0 %v160
  %189 = vmatpush.bf16.msra.mxu0 %v159
  %190 = vmatpush.bf16.msra.mxu0 %v158
  %191 = vmatpush.bf16.msra.mxu0 %v157
  %192 = vmatpush.bf16.msra.mxu0 %v156
  %193 = vmatmul.bf16.gmra.mxu0 %v107
  %v194 = vpop.f32.mrf.mxu0
  %v195 = vadd.f32 0.0, %v194
  %v196 = vpop.f32.mrf.mxu0
  %197 = vdwg.mxu0
  %v198 = vmul.f32 %v182, %v182
  %v199 = vsub.f32 %v195, %v198
  %v200 = vmax.f32 %v199, 0.0
  %v201 = vsub.f32 %v104, %v182
  %v202 = vadd.f32 %v200, 1e-05
  %v203 = vrsqrt.pop %v202
  %v204 = vmul.f32 %v203, %v202
  %v205 = vmul.f32 %v204, %v203
  %v206 = vmul.f32 0.5, %v205
  %v207 = vsub.f32 1.5, %v206
  %v208 = vmul.f32 %v203, %v207
  %vm209 = vweird.f32 %v202
  %vm210 = vweird.f32 %v203
  %vm211 = vmor %vm209, %vm210
  %v212 = vsel %vm211, %v203, %v208
  %v213 = vmul.f32 %v201, %v212
  %v214 = vperm.slane %v40, 1
  %v215 = vmul.f32 %v213, %v214
  %v216 = vperm.slane %v40, 2
  %v217 = vadd.f32 %v215, %v216
  %218 = vst [vmem:[%s5] sm:$0xff] %v217
  // Predicated region
  $region22: #{vrnn_forward.1} parent=0 // pred_check
    _
  $region23: #{vrnn_forward.1} parent=0 // pred_check_branch
    %220 = sbr.rel (0) target = $region25
  $region24: #{vrnn_forward.1} parent=0 // pred_region
    _
  $region25: #{vrnn_forward.1} parent=0 // pred_fallthru
    _
  // Predicated region
  $region26: #{vrnn_forward.1} parent=0 // pred_check
    _
  $region27: #{vrnn_forward.1} parent=0 // pred_check_branch
    %222 = sbr.rel (0) target = $region29
  $region28: #{vrnn_forward.1} parent=0 // pred_region
    _
  $region29: #{vrnn_forward.1} parent=0 // pred_fallthru
    _

</llo_original>
